<compile_context>
chip_gen: v7x
topology: tpu7x:2x2x1
jax: 0.10.0
libtpu: 0.0.40
codegen_flags: <defaults>
</compile_context>

<pallas_src>
import numpy as np
import jax
import jax.numpy as jnp
from jax.experimental import pallas as pl
from jax.experimental.pallas import tpu as pltpu


# ----------------------------------------------------------------------------
# _gen_coords() glue (plain numpy, deterministic) -- mirrors the PyTorch code.
# ----------------------------------------------------------------------------
def get_min_max_coords(size):
    # size = (range_y, range_x, resolution)
    min_x = -size[1] + size[2] / 2.0
    max_x = size[1] - size[2] / 2.0
    min_y = -size[0] + size[2] / 2.0
    max_y = size[0] - size[2] / 2.0
    return min_x, max_x, min_y, max_y


def gen_coords(bev_size, task_size):
    """Absolute pixel coordinates (x, y) in the BEV feature map for every task pixel.

    Matches BevDecoder._gen_coords up to (but not including) adjust_coords, which
    only re-encodes the same coordinates for the Horizon hardware GridSample (the
    sampled values are identical in float).
    """
    bev_min_x, bev_max_x, bev_min_y, bev_max_y = get_min_max_coords(bev_size)
    bev_W = int(bev_size[1] * 2 / bev_size[2])
    bev_H = int(bev_size[0] * 2 / bev_size[2])
    task_min_x, task_max_x, task_min_y, task_max_y = get_min_max_coords(task_size)
    task_W = int(task_size[1] * 2 / task_size[2])
    task_H = int(task_size[0] * 2 / task_size[2])

    x = np.linspace(task_min_x, task_max_x, task_W).reshape((1, task_W)).repeat(
        task_H, axis=0) / bev_max_x
    y = np.linspace(task_min_y, task_max_y, task_H).reshape((task_H, 1)).repeat(
        task_W, axis=1) / bev_max_y
    x = (x + 1) * ((bev_W - 1) / 2)
    y = (y + 1) * ((bev_H - 1) / 2)
    new_coords = np.stack([x, y], axis=-1).astype(np.float32)  # (task_H, task_W, 2)
    # TODO(synk): adjust_coords / QuantStub only re-encode + fake-quantize the coords
    # for the Horizon GridSample op; in float they are a no-op on the sampled values.
    return new_coords, (bev_H, bev_W), (task_H, task_W)


def build_sampling_matrix(coords_xy, bev_hw):
    """Dense bilinear-sampling matrix S: sampled = S @ feat_flat (zeros padding)."""
    Hb, Wb = bev_hw
    Ht, Wt, _ = coords_xy.shape
    Nt, Nb = Ht * Wt, Hb * Wb
    x = coords_xy[..., 0].reshape(-1).astype(np.float64)
    y = coords_xy[..., 1].reshape(-1).astype(np.float64)
    x0 = np.floor(x); y0 = np.floor(y)
    x1 = x0 + 1.0;    y1 = y0 + 1.0
    wx1 = x - x0; wx0 = 1.0 - wx1
    wy1 = y - y0; wy0 = 1.0 - wy1

    S = np.zeros((Nt, Nb), dtype=np.float64)
    rows = np.arange(Nt)
    for xi, yi, w in ((x0, y0, wx0 * wy0), (x1, y0, wx1 * wy0),
                      (x0, y1, wx0 * wy1), (x1, y1, wx1 * wy1)):
        valid = (xi >= 0) & (xi <= Wb - 1) & (yi >= 0) & (yi <= Hb - 1)
        cols = (np.clip(yi, 0, Hb - 1) * Wb + np.clip(xi, 0, Wb - 1)).astype(np.int64)
        np.add.at(S, (rows, cols), np.where(valid, w, 0.0))
    return S.astype(np.float32)


# ----------------------------------------------------------------------------
# Pallas kernel: grid_sample-as-matmul on the head-projected features.
#   grid = (num_nt_tiles ["parallel"], num_nb_tiles ["arbitrary"])
# ----------------------------------------------------------------------------
def bev_decoder_kernel(hf_ref, st_ref, bias_ref, out_ref):
    # hf_ref:   (BKp, TNB) bf16  head-projected features, tiled along Nb
    # st_ref:   (TNB, TN)  bf16  tile of the bilinear sampling matrix S^T
    # bias_ref: (BKp, 1)   f32   head bias (repeated per batch, channel-padded)
    # out_ref:  (BKp, TN)  f32   output tile; resident across the Nb axis, used as
    #                            the accumulator (init at k==0, bias at k==last)
    k = pl.program_id(1)

    @pl.when(k == 0)
    def _():
        out_ref[...] = jnp.zeros_like(out_ref)

    out_ref[...] += jnp.dot(hf_ref[...], st_ref[...],
                            preferred_element_type=jnp.float32)

    @pl.when(k == pl.num_programs(1) - 1)
    def _():
        out_ref[...] += bias_ref[...]


def _vmem_capacity_bytes():
    try:
        return int(pltpu.get_tpu_info().vmem_capacity_bytes)
    except Exception:
        return 64 << 20          # conservative fallback (v7x per-TC VMEM)


def _derive_tiles(Nb, Nt, BKp, vmem_budget, tn_cap=None, tnb_cap=4096):
    """Pick (TN, TNB) so the per-step VMEM residency fits the budget.

    Residency model:
        2 * TNB * TN * 2     S^T tile, double-buffered, bf16
      + 2 * BKp * TNB * 2    hf tile, double-buffered, bf16
      + 2 * BKp * TN * 4     output/accumulator tile, double-buffered, f32
    """
    TNB = -(-Nb // 128) * 128                       # full (padded) Nb ...
    if tnb_cap is not None:                         # ... bounded so VMEM is Nb-independent
        TNB = min(TNB, max(128, (tnb_cap // 128) * 128))

    denom = 4 * TNB + 8 * BKp
    avail = vmem_budget - 4 * BKp * TNB - (1 << 20)  # 1 MiB slack for bias / internals
    TN = max(128, (max(avail, 0) // denom // 128) * 128)
    if tn_cap is not None:
        TN = min(TN, max(128, (tn_cap // 128) * 128))
    TN = min(TN, -(-Nt // 128) * 128)               # never bigger than padded Nt
    return int(TN), int(TNB)


def bev_decoder_forward(feat_nchw, S, head_w, head_b, task_hw, *, tn=None, tnb=4096):
    """feat_nchw: (B, C, Hb, Wb) f32, S: (Ht*Wt, Hb*Wb) f32 -> pred (B, K, Ht, Wt) f32."""
    B, C, Hb, Wb = feat_nchw.shape
    Ht, Wt = task_hw
    Nb, Nt = Hb * Wb, Ht * Wt
    K = head_w.shape[0]

    Kp = -(-K // 8) * 8                              # pad head channels to sublane multiple
    BKp = B * Kp

    # --- head projection hoisted to XLA (tiny: 2*B*Kp*C*Nb flops), cast to bf16 once
    feat_flat = feat_nchw.reshape(B, C, Nb).astype(jnp.float32)
    wh = jnp.zeros((Kp, C), jnp.float32).at[:K, :].set(head_w.astype(jnp.float32))
    hf = jnp.einsum("kc,bcn->bkn", wh, feat_flat,
                    precision=jax.lax.Precision.HIGHEST)        # (B, Kp, Nb) f32
    hf = hf.reshape(BKp, Nb).astype(jnp.bfloat16)                # (BKp, Nb) bf16

    # --- tiling derived from a per-generation VMEM budget ------------------------
    vmem_cap = _vmem_capacity_bytes()                # 64 MiB (v7x) / 128 MiB (v5e, v6e)
    vmem_budget = int(vmem_cap * 0.70)
    TN, TNB = _derive_tiles(Nb, Nt, BKp, vmem_budget, tn_cap=tn, tnb_cap=tnb)

    Nb_pad = -(-Nb // TNB) * TNB
    Nt_pad = -(-Nt // TN) * TN
    num_nt_tiles = Nt_pad // TN
    num_nb_tiles = Nb_pad // TNB

    # --- operand preparation ------------------------------------------------------
    hf = jnp.pad(hf, ((0, 0), (0, Nb_pad - Nb)))                            # (BKp, Nb_pad)
    s_t = jnp.pad(S.astype(jnp.bfloat16).T,
                  ((0, Nb_pad - Nb), (0, Nt_pad - Nt)))                     # (Nb_pad, Nt_pad)
    bias = jnp.zeros((Kp,), jnp.float32).at[:K].set(head_b.astype(jnp.float32))
    bias_col = jnp.tile(bias, (B,)).reshape(BKp, 1)

    # --- VMEM limit: cover the actual per-step need, never exceed the physical cap
    vmem_need = (2 * TNB * TN * 2          # S^T tile (bf16), double-buffered
                 + 2 * BKp * TNB * 2       # hf tile (bf16), double-buffered
                 + 2 * BKp * TN * 4        # output tile (f32), double-buffered
                 + 2 * BKp * 128 * 4)      # bias (lane-padded)
    vmem_limit = int(min(vmem_cap, max(int(1.5 * vmem_need), 16 << 20)))

    flops = int(2 * BKp * Nb_pad * Nt_pad)
    bytes_accessed = int(Nb_pad * Nt_pad * 2 + BKp * Nb_pad * 2
                         + BKp * Nt_pad * 4 + BKp * 4)

    out = pl.pallas_call(
        bev_decoder_kernel,
        out_shape=jax.ShapeDtypeStruct((BKp, Nt_pad), jnp.float32),
        grid_spec=pltpu.PrefetchScalarGridSpec(
            num_scalar_prefetch=0,
            grid=(num_nt_tiles, num_nb_tiles),
            in_specs=[
                pl.BlockSpec((BKp, TNB), lambda i, k: (0, k)),   # hf   (tiled over Nb)
                pl.BlockSpec((TNB, TN), lambda i, k: (k, i)),    # S^T  (tiled Nb x Nt)
                pl.BlockSpec((BKp, 1), lambda i, k: (0, 0)),     # bias (constant)
            ],
            out_specs=pl.BlockSpec((BKp, TN), lambda i, k: (0, i)),
        ),
        compiler_params=pltpu.CompilerParams(
            # Nt tiles are independent -> "parallel" (megacore on v7x);
            # Nb is the reduction axis accumulated into the resident output block.
            dimension_semantics=("parallel", "arbitrary"),
            vmem_limit_bytes=vmem_limit),
        cost_estimate=pl.CostEstimate(
            flops=flops, transcendentals=0, bytes_accessed=bytes_accessed),
    )(hf, s_t, bias_col)

    # Drop channel / spatial padding and restore NCHW.
    pred = out.reshape(B, Kp, Nt_pad)[:, :K, :Nt].reshape(B, K, Ht, Wt)
    # TODO(synk): self.decoder (_decode) is an injected module not defined in the
    # reference file; the eval path returns the head prediction unchanged here.
    return pred


# ----------------------------------------------------------------------------
# Pure-JAX f32 reference (silent correctness check).
# ----------------------------------------------------------------------------
def reference_forward(feat_nchw, S, head_w, head_b, task_hw):
    B, C, Hb, Wb = feat_nchw.shape
    Ht, Wt = task_hw
    feat_flat = feat_nchw.reshape(B, C, Hb * Wb)
    sampled = jnp.einsum("bcn,tn->bct", feat_flat, S,
                         precision=jax.lax.Precision.HIGHEST)       # (B, C, Nt)
    pred = jnp.einsum("kc,bct->bkt", head_w, sampled,
                      precision=jax.lax.Precision.HIGHEST) + head_b[None, :, None]
    return pred.reshape(B, head_w.shape[0], Ht, Wt)


if __name__ == "__main__":
    # Small, deterministic config.
    bev_size = (8.0, 8.0, 1.0)     # -> BEV feature 16 x 16   (Nb = 256)
    task_size = (4.0, 8.0, 0.5)    # -> task feature 16 x 32  (Nt = 512, fractional coords)
    B, C, K = 2, 8, 4              # batch, channels, head output channels

    coords, (Hb, Wb), (Ht, Wt) = gen_coords(bev_size, task_size)
    S_np = build_sampling_matrix(coords, (Hb, Wb))                  # (Ht*Wt, Hb*Wb)

    key = jax.random.PRNGKey(0)
    k_feat, k_w, k_b = jax.random.split(key, 3)
    feat = jax.random.normal(k_feat, (B, C, Hb, Wb), dtype=jnp.float32)   # feats[0], NCHW
    head_w = jax.random.normal(k_w, (K, C), dtype=jnp.float32) * 0.1      # 1x1 conv weight
    head_b = jax.random.normal(k_b, (K,), dtype=jnp.float32) * 0.01
    S = jnp.asarray(S_np)

    # tn=256 / tnb=128 -> grid (2, 2), exercising both the parallel Nt axis and the
    # Nb accumulation path (init at k==0, bias at k==last).
    pred = bev_decoder_forward(feat, S, head_w, head_b, (Ht, Wt), tn=256, tnb=128)
    pred = jax.block_until_ready(pred)

    ref = reference_forward(feat, S, head_w, head_b, (Ht, Wt))
    # Both MXU operands (hf and S^T) are bf16 with f32 accumulation -> loose tolerance
    # vs the f32 reference.
    np.testing.assert_allclose(np.asarray(pred), np.asarray(ref), rtol=2e-2, atol=2e-2)

    print("KERNEL_OK")
</pallas_src>

<mosaic_0001>
module attributes {stable_mosaic.version = 11 : i64} {
  func.func @bev_decoder_kernel(%arg0: i32, %arg1: i32, %arg2: memref<16x128xbf16, #tpu.memory_space<vmem>>, %arg3: memref<128x256xbf16, #tpu.memory_space<vmem>>, %arg4: memref<16x1xf32, #tpu.memory_space<vmem>>, %arg5: memref<16x256xf32, #tpu.memory_space<vmem>>) attributes {dimension_semantics = [#tpu.dimension_semantics<parallel>, #tpu.dimension_semantics<arbitrary>], iteration_bounds = array<i64: 2, 2>, scalar_prefetch = 0 : i64, scratch_operands = 0 : i64, tpu.core_type = #tpu.core_type<tc>, window_params = [{transform_indices = @transform_0, window_bounds = array<i64: 16, 128>}, {transform_indices = @transform_1, window_bounds = array<i64: 128, 256>}, {pipeline_mode = #tpu.pipeline_mode<synchronous>, transform_indices = @transform_2, window_bounds = array<i64: 16, 1>}, {transform_indices = @transform_3, window_bounds = array<i64: 16, 256>}]} {
    %c0_i32 = arith.constant 0 : i32
    %0 = arith.cmpi eq, %arg1, %c0_i32 : i32
    %1 = arith.extui %0 : i1 to i32
    %c0_i32_0 = arith.constant 0 : i32
    %2 = arith.cmpi ne, %1, %c0_i32_0 : i32
    scf.if %2 {
      %cst_9 = arith.constant 0.000000e+00 : f32
      %12 = vector.broadcast %cst_9 : f32 to vector<16x256xf32>
      %c0_10 = arith.constant 0 : index
      %c0_11 = arith.constant 0 : index
      %13 = vector.load %arg5[%c0_10, %c0_11] : memref<16x256xf32, #tpu.memory_space<vmem>>, vector<16x256xf32>
      tpu.vector_store %arg5[%c0_10, %c0_11], %12 {strides = array<i32>} : memref<16x256xf32, #tpu.memory_space<vmem>>, vector<16x256xf32>,
    } else {
    }
    %c0 = arith.constant 0 : index
    %c0_1 = arith.constant 0 : index
    %3 = vector.load %arg5[%c0, %c0_1] : memref<16x256xf32, #tpu.memory_space<vmem>>, vector<16x256xf32>
    %c0_2 = arith.constant 0 : index
    %c0_3 = arith.constant 0 : index
    %4 = vector.load %arg2[%c0_2, %c0_3] : memref<16x128xbf16, #tpu.memory_space<vmem>>, vector<16x128xbf16>
    %c0_4 = arith.constant 0 : index
    %c0_5 = arith.constant 0 : index
    %5 = vector.load %arg3[%c0_4, %c0_5] : memref<128x256xbf16, #tpu.memory_space<vmem>>, vector<128x256xbf16>
    %cst = arith.constant dense<0.000000e+00> : vector<16x256xf32>
    %6 = tpu.matmul %4, %5, %cst {dimension_numbers = #tpu.dot_dimension_numbers<[1], [0], [0], [1], [0, 0, 1, 1], [], []>} : vector<16x128xbf16>, vector<128x256xbf16>, vector<16x256xf32> -> vector<16x256xf32>
    %7 = arith.addf %3, %6 : vector<16x256xf32>
    %c0_6 = arith.constant 0 : index
    %c0_7 = arith.constant 0 : index
    %8 = vector.load %arg5[%c0_6, %c0_7] : memref<16x256xf32, #tpu.memory_space<vmem>>, vector<16x256xf32>
    tpu.vector_store %arg5[%c0_6, %c0_7], %7 {strides = array<i32>} : memref<16x256xf32, #tpu.memory_space<vmem>>, vector<16x256xf32>,
    %c1_i32 = arith.constant 1 : i32
    %9 = arith.cmpi eq, %arg1, %c1_i32 : i32
    %10 = arith.extui %9 : i1 to i32
    %c0_i32_8 = arith.constant 0 : i32
    %11 = arith.cmpi ne, %10, %c0_i32_8 : i32
    scf.if %11 {
      %c0_9 = arith.constant 0 : index
      %c0_10 = arith.constant 0 : index
      %12 = vector.load %arg5[%c0_9, %c0_10] : memref<16x256xf32, #tpu.memory_space<vmem>>, vector<16x256xf32>
      %c0_11 = arith.constant 0 : index
      %c0_12 = arith.constant 0 : index
      %13 = vector.load %arg4[%c0_11, %c0_12] : memref<16x1xf32, #tpu.memory_space<vmem>>, vector<16x1xf32>
      %14 = vector.broadcast %13 : vector<16x1xf32> to vector<16x256xf32>
      %15 = arith.addf %12, %14 : vector<16x256xf32>
      %c0_13 = arith.constant 0 : index
      %c0_14 = arith.constant 0 : index
      %16 = vector.load %arg5[%c0_13, %c0_14] : memref<16x256xf32, #tpu.memory_space<vmem>>, vector<16x256xf32>
      tpu.vector_store %arg5[%c0_13, %c0_14], %15 {strides = array<i32>} : memref<16x256xf32, #tpu.memory_space<vmem>>, vector<16x256xf32>,
    } else {
    }
    return
  }
  func.func @transform_0(%arg0: i32, %arg1: i32) -> (i32, i32) {
    %c0_i32 = arith.constant 0 : i32
    %c0_i32_0 = arith.constant 0 : i32
    return %c0_i32, %arg1 : i32, i32
  }
  func.func @transform_1(%arg0: i32, %arg1: i32) -> (i32, i32) {
    %c0_i32 = arith.constant 0 : i32
    return %arg1, %arg0 : i32, i32
  }
  func.func @transform_2(%arg0: i32, %arg1: i32) -> (i32, i32) {
    %c0_i32 = arith.constant 0 : i32
    %c0_i32_0 = arith.constant 0 : i32
    %c0_i32_1 = arith.constant 0 : i32
    return %c0_i32, %c0_i32_0 : i32, i32
  }
  func.func @transform_3(%arg0: i32, %arg1: i32) -> (i32, i32) {
    %c0_i32 = arith.constant 0 : i32
    %c0_i32_0 = arith.constant 0 : i32
    return %c0_i32, %arg0 : i32, i32
  }
}

</mosaic_0001>

<llo_original>
// kernel: tpu_custom_call.1
$region0: #{tpu_custom_call.1}
  #allocation0 [shape = 'u32[]', space=smem, size = 0x4, offset = 0x4, fixed_abs, tag = 'smem constant byte address 0x4 - core index']
  #allocation1 [shape = 'u32[144,128]{1,0:T(1,128)}', space=vmem, size = 0x12000, scoped, tag = 'internal scratch']
  %s0 = inlined_call_operand.vmem [shape: bf16[16,256], index: 0, kind: input, shape index: {}]
  %s1 = inlined_call_operand.hbm [shape: bf16[256,512], index: 1, kind: input, shape index: {}]
  %s2 = inlined_call_operand.vmem [shape: f32[16,1], index: 2, kind: input, shape index: {}]
  %s3 = inlined_call_operand.hbm [shape: f32[16,512], index: 3, kind: output, shape index: {}]
  %s4 = sld [smem:[#allocation0]]
  $region98: #{tpu_custom_call.1} parent=0
    _
  %s6 = ssub.s32 1, %s4
  %s7 = scalar_select 0, %s6, %s4
  $region1: #{tpu_custom_call.1} parent=0
    #allocation2 [shape = 'u8[8192]{0}', space=vmem, size = 0x2000, scoped, tag = 'input window, operand 0']
    #allocation3 [shape = 'u8[131072]{0}', space=vmem, size = 0x20000, scoped, tag = 'input window, operand 1']
    #allocation4 [shape = 's32[2]{0}', space=sflag, size = 0x8, scoped, tag = 'scoped memory for tpu_custom_call.1']
    #allocation5 [shape = 's32[2]{0}', space=sflag, size = 0x8, scoped, tag = 'scoped memory for tpu_custom_call.1']
    #allocation6 [shape = 'u8[32768]{0}', space=vmem, size = 0x8000, scoped, tag = 'output window, operand 0']
    %8 = vsyncpa [#allocation4], 0
    %s9 = scalar_lea.sflag [#allocation4], 1
    %10 = vsyncpa %s9, 0
    %11 = vsyncpa [#allocation5], 0
    %s12 = scalar_lea.sflag [#allocation5], 1
    %13 = vsyncpa %s12, 0
    loop: start=0, step=1, limit=6
    $region2: #{tpu_custom_call.1} parent=1 // loop_pre_header
      _
    $region3: #{tpu_custom_call.1} parent=1 // loop_header
      %s15 = sphi 0, %s19
      %p16 = scmp.ge.s32.totalorder %s15, 6
      %s22 = sphi 0, %s34
      %s23 = sphi 0, %s30
      %s24 = sphi 0, %s22
      %s25 = sphi 0, %s23
      %s26 = sphi 0, %s24
      %s27 = sphi 0, %s25
      %s37 = sphi 0, %s39
      %s40 = sphi 0, %s37
      %s41 = sphi 0, %s40
      %s57 = sphi 0, %s41
      %s65 = sphi 0, %s67
      %s68 = sphi 0, %s65
      %s69 = sphi 0, %s68
      %s85 = sphi 0, %s69
      %s89 = sphi 0, %s89
      %s91 = sphi 0, %s89
      %s92 = sphi 0, %s91
      %s106 = sphi 0, %s92
      %s112 = sphi 0, %s114
      %s115 = sphi 0, %s112
      %s116 = sphi 0, %s115
      %s132 = sphi 0, %s116
    $region4: #{tpu_custom_call.1} parent=1 // loop_header_branch
      %18 = sbr.rel (%p16) target = $region8
    $region5: #{tpu_custom_call.1} parent=1 // loop_body
      %s20 = ssub.s32 %s15, 1
      %s21 = ssub.s32 %s15, 2
      %s28 = sadd.s32 1, %s23
      %p29 = scmp.ge.s32.totalorder %s28, 2
      %s30 = scalar_select %p29, 0, %s28
      %s31 = sadd.s32 1, %s22
      %s32 = scalar_select %p29, %s31, %s22
      %p33 = scmp.ge.s32.totalorder %s32, 2
      %s34 = scalar_select %p33, 0, %s32
      %s35 = ssub.s32 %s23, %s30
      %p36 = scmp.eq.s32.totalorder %s35, 0
      %s38 = sadd.s32 %s37, 1
      %s39 = scalar_select %p36, %s37, %s38
      %p42 = pneg %p36
      %p43 = scmp.eq.s32.totalorder %s15, 3
      %p44 = por %p42, %p43
      %p45 = scmp.ne.s32.totalorder %s37, %s40
      %p46 = scmp.eq.s32.totalorder %s15, 0
      %p47 = por %p45, %p46
      %p48 = scmp.ne.s32.totalorder %s37, %s40
      %p49 = scmp.eq.s32.totalorder %s20, 3
      %p50 = por %p48, %p49
      %p51 = scmp.ne.s32.totalorder %s40, %s41
      %p52 = scmp.eq.s32.totalorder %s20, 0
      %p53 = por %p51, %p52
      %p54 = scmp.ne.s32.totalorder %s40, %s41
      %p55 = scmp.eq.s32.totalorder %s21, 3
      %p56 = por %p54, %p55
      %p58 = scmp.ne.s32.totalorder %s41, %s57
      %p59 = scmp.eq.s32.totalorder %s21, 0
      %p60 = por %p58, %p59
      %s61 = ssub.s32 %s23, %s30
      %s62 = ssub.s32 %s22, %s34
      %s63 = sor.u32 %s61, %s62
      %p64 = scmp.eq.s32.totalorder %s63, 0
      %s66 = sadd.s32 %s65, 1
      %s67 = scalar_select %p64, %s65, %s66
      %p70 = pneg %p64
      %p71 = scmp.eq.s32.totalorder %s15, 3
      %p72 = por %p70, %p71
      %p73 = scmp.ne.s32.totalorder %s65, %s68
      %p74 = scmp.eq.s32.totalorder %s15, 0
      %p75 = por %p73, %p74
      %p76 = scmp.ne.s32.totalorder %s65, %s68
      %p77 = scmp.eq.s32.totalorder %s20, 3
      %p78 = por %p76, %p77
      %p79 = scmp.ne.s32.totalorder %s68, %s69
      %p80 = scmp.eq.s32.totalorder %s20, 0
      %p81 = por %p79, %p80
      %p82 = scmp.ne.s32.totalorder %s68, %s69
      %p83 = scmp.eq.s32.totalorder %s21, 3
      %p84 = por %p82, %p83
      %p86 = scmp.ne.s32.totalorder %s69, %s85
      %p87 = scmp.eq.s32.totalorder %s21, 0
      %p88 = por %p86, %p87
      %s90 = sadd.s32 %s89, 1
      %p93 = scmp.eq.s32.totalorder %s15, 3
      %p94 = scmp.ne.s32.totalorder %s89, %s91
      %p95 = scmp.eq.s32.totalorder %s15, 0
      %p96 = por %p94, %p95
      %p97 = scmp.ne.s32.totalorder %s89, %s91
      %p98 = scmp.eq.s32.totalorder %s20, 3
      %p99 = por %p97, %p98
      %p100 = scmp.ne.s32.totalorder %s91, %s92
      %p101 = scmp.eq.s32.totalorder %s20, 0
      %p102 = por %p100, %p101
      %p103 = scmp.ne.s32.totalorder %s91, %s92
      %p104 = scmp.eq.s32.totalorder %s21, 3
      %p105 = por %p103, %p104
      %p107 = scmp.ne.s32.totalorder %s92, %s106
      %p108 = scmp.eq.s32.totalorder %s21, 0
      %p109 = por %p107, %p108
      %s110 = ssub.s32 %s22, %s34
      %p111 = scmp.eq.s32.totalorder %s110, 0
      %s113 = sadd.s32 %s112, 1
      %s114 = scalar_select %p111, %s112, %s113
      %p117 = pneg %p111
      %p118 = scmp.eq.s32.totalorder %s15, 3
      %p119 = por %p117, %p118
      %p120 = scmp.ne.s32.totalorder %s112, %s115
      %p121 = scmp.eq.s32.totalorder %s15, 0
      %p122 = por %p120, %p121
      %p123 = scmp.ne.s32.totalorder %s112, %s115
      %p124 = scmp.eq.s32.totalorder %s20, 3
      %p125 = por %p123, %p124
      %p126 = scmp.ne.s32.totalorder %s115, %s116
      %p127 = scmp.eq.s32.totalorder %s20, 0
      %p128 = por %p126, %p127
      %p129 = scmp.ne.s32.totalorder %s115, %s116
      %p130 = scmp.eq.s32.totalorder %s21, 3
      %p131 = por %p129, %p130
      %p133 = scmp.ne.s32.totalorder %s116, %s132
      %p134 = scmp.eq.s32.totalorder %s21, 0
      %p135 = por %p133, %p134
      %p136 = scmp.le.s32.totalorder 1, %s15
      %p137 = scmp.lt.s32.totalorder %s15, 5
      %p138 = pnand %p136, %p137
      %p139 = pneg %p138
      // Predicated region
      $region9: #{tpu_custom_call.1} parent=5 // pred_check
        _
      $region10: #{tpu_custom_call.1} parent=5 // pred_check_branch
        %141 = sbr.rel (%p138) target = $region12
      $region11: #{tpu_custom_call.1} parent=5 // pred_region
        %s142 = ssub.s32 %s15, 1
        // Predicated region
        $region13: #{tpu_custom_call.1} parent=11 // pred_check
          %p143 = pneg %p102
        $region14: #{tpu_custom_call.1} parent=11 // pred_check_branch
          %145 = sbr.rel (%p143) target = $region16
        $region15: #{tpu_custom_call.1} parent=11 // pred_region
          _
        $region16: #{tpu_custom_call.1} parent=11 // pred_fallthru
          _
      $region12: #{tpu_custom_call.1} parent=5 // pred_fallthru
        _
      %p146 = scmp.lt.s32.totalorder %s15, 4
      // Predicated region
      $region17: #{tpu_custom_call.1} parent=5 // pred_check
        %p147 = pneg %p146
      $region18: #{tpu_custom_call.1} parent=5 // pred_check_branch
        %149 = sbr.rel (%p147) target = $region20
      $region19: #{tpu_custom_call.1} parent=5 // pred_region
        // Predicated region
        $region21: #{tpu_custom_call.1} parent=19 // pred_check
          %p150 = pneg %p47
        $region22: #{tpu_custom_call.1} parent=19 // pred_check_branch
          %152 = sbr.rel (%p150) target = $region24
        $region23: #{tpu_custom_call.1} parent=19 // pred_region
          %s153 = sand.u32 %s37, 1
          %s154 = sand.u32 %s37, 1
          %s155 = smul.addr %s154, 8
          %s156 = scalar_lea.vmem [#allocation2], %s155
          %s157 = smul.addr %s23, 4
          %s158 = scalar_lea.vmem %s0, %s157
          // Predicated region
          $region25: #{tpu_custom_call.1} parent=23 // pred_check
            _
          $region26: #{tpu_custom_call.1} parent=23 // pred_check_branch
            %160 = sbr.rel (0) target = $region28
          $region27: #{tpu_custom_call.1} parent=23 // pred_region
            // Predicated region
            $region29: #{tpu_custom_call.1} parent=27 // pred_check
              _
            $region30: #{tpu_custom_call.1} parent=27 // pred_check_branch
              %162 = sbr.rel target = $region32
            $region31: #{tpu_custom_call.1} parent=27 // pred_region
              // Predicated region
              $region44: #{tpu_custom_call.1} parent=31 // pred_check
                _
              $region45: #{tpu_custom_call.1} parent=31 // pred_check_branch
                %179 = sbr.rel (0) target = $region47
              $region46: #{tpu_custom_call.1} parent=31 // pred_region
                loop: start=0, step=1, limit=1
                $region48: #{tpu_custom_call.1} parent=46 // loop_pre_header
                  _
                $region49: #{tpu_custom_call.1} parent=46 // loop_header
                  %s181 = sphi 0, %s185
                  %p182 = scmp.ge.s32.totalorder %s181, 1
                  %s186 = sphi %s158, %s158
                  %s187 = sphi %s156, %s156
                $region50: #{tpu_custom_call.1} parent=46 // loop_header_branch
                  %184 = sbr.rel (%p182) target = $region54
                $region51: #{tpu_custom_call.1} parent=46 // loop_body
                  _
                $region52: #{tpu_custom_call.1} parent=46 // loop_footer
                  %s185 = sadd.s32 1, %s181
                $region53: #{tpu_custom_call.1} parent=46 // loop_footer_branch
                  %180 = sbr.rel target = $region49
                $region54: #{tpu_custom_call.1} parent=46 // loop_exit
                  _
                loop: start=0, step=1, limit=1
                $region55: #{tpu_custom_call.1} parent=46 // loop_pre_header
                  _
                $region56: #{tpu_custom_call.1} parent=46 // loop_header
                  %s190 = sphi 0, %s194
                  %p191 = scmp.ge.s32.totalorder %s190, 1
                  %s195 = sphi %s158, %s158
                  %s196 = sphi %s156, %s156
                $region57: #{tpu_custom_call.1} parent=46 // loop_header_branch
                  %193 = sbr.rel (%p191) target = $region61
                $region58: #{tpu_custom_call.1} parent=46 // loop_body
                  %v197 = vld [vmem:[%s195] sm:$0xf]
                  %198 = vst [vmem:[%s196] sm:$0xf] %v197
                  %v199 = vld [vmem:[%s195 + $0x8] sm:$0xf]
                  %200 = vst [vmem:[%s196 + $0x4] sm:$0xf] %v199
                $region59: #{tpu_custom_call.1} parent=46 // loop_footer
                  %s194 = sadd.s32 1, %s190
                $region60: #{tpu_custom_call.1} parent=46 // loop_footer_branch
                  %189 = sbr.rel target = $region56
                $region61: #{tpu_custom_call.1} parent=46 // loop_exit
                  _
              $region47: #{tpu_custom_call.1} parent=31 // pred_fallthru
                _
            $region32: #{tpu_custom_call.1} parent=27 // pred_fallthru
              _
            // Predicated region
            $region33: #{tpu_custom_call.1} parent=27 // pred_check
              _
            $region34: #{tpu_custom_call.1} parent=27 // pred_check_branch
              %164 = sbr.rel (0) target = $region36
            $region35: #{tpu_custom_call.1} parent=27 // pred_region
              loop: start=0, step=1, limit=1
              $region37: #{tpu_custom_call.1} parent=35 // loop_pre_header
                _
              $region38: #{tpu_custom_call.1} parent=35 // loop_header
                %s167 = sphi 0, %s171
                %p168 = scmp.ge.s32.totalorder %s167, 1
                %s172 = sphi %s158, %s158
                %s173 = sphi %s156, %s156
              $region39: #{tpu_custom_call.1} parent=35 // loop_header_branch
                %170 = sbr.rel (%p168) target = $region43
              $region40: #{tpu_custom_call.1} parent=35 // loop_body
                %v174 = vld [vmem:[%s172] sm:$0xf]
                %175 = vst [vmem:[%s173] sm:$0xf] %v174
                %v176 = vld [vmem:[%s172 + $0x8] sm:$0xf]
                %177 = vst [vmem:[%s173 + $0x4] sm:$0xf] %v176
              $region41: #{tpu_custom_call.1} parent=35 // loop_footer
                %s171 = sadd.s32 1, %s167
              $region42: #{tpu_custom_call.1} parent=35 // loop_footer_branch
                %166 = sbr.rel target = $region38
              $region43: #{tpu_custom_call.1} parent=35 // loop_exit
                _
            $region36: #{tpu_custom_call.1} parent=27 // pred_fallthru
              _
          $region28: #{tpu_custom_call.1} parent=23 // pred_fallthru
            _
          %201 = vnop
        $region24: #{tpu_custom_call.1} parent=19 // pred_fallthru
          _
        // Predicated region
        $region62: #{tpu_custom_call.1} parent=19 // pred_check
          %p202 = pneg %p75
        $region63: #{tpu_custom_call.1} parent=19 // pred_check_branch
          %204 = sbr.rel (%p202) target = $region65
        $region64: #{tpu_custom_call.1} parent=19 // pred_region
          %s205 = sand.u32 %s65, 1
          %s206 = scalar_lea.sflag [#allocation4], %s205
          %s207 = sand.u32 %s65, 1
          %s208 = smul.addr %s207, 128
          %s209 = scalar_lea.vmem [#allocation3], %s208
          %s210 = smul.u32 16, %s23
          %s211 = smul.u32 2, %s22
          %s213 = ssub.s32 2048, 2048
          %214 = vsyncadd %s206, %s213
          %s215 = smul.addr %s210, 4
          %s216 = sadd.s32 %s211, %s215
          %s217 = smul.addr %s216, 64
          %s218 = scalar_lea.hbm %s1, %s217
          %s219 = sshll.u32 %s209, 4
          %s220 = int_to_ptr.vmem [resolvable:$true] %s219
          %225 = dma.hbm_to_vmem [thread:$0]  %s218, 2048, %s220, %s206, 256, 128, 8
        $region65: #{tpu_custom_call.1} parent=19 // pred_fallthru
          _
      $region20: #{tpu_custom_call.1} parent=5 // pred_fallthru
        _
      %p226 = scmp.le.s32.totalorder 1, %s15
      %p227 = scmp.lt.s32.totalorder %s15, 5
      %p228 = pnand %p226, %p227
      %p229 = pneg %p228
      // Predicated region
      $region66: #{tpu_custom_call.1} parent=5 // pred_check
        _
      $region67: #{tpu_custom_call.1} parent=5 // pred_check_branch
        %231 = sbr.rel (%p228) target = $region69
      $region68: #{tpu_custom_call.1} parent=5 // pred_region
        %s232 = ssub.s32 %s15, 1
        %s233 = sand.u32 %s40, 1
        %s234 = sand.u32 %s40, 1
        %s235 = smul.addr %s234, 8
        %s236 = scalar_lea.vmem [#allocation2], %s235
        // Predicated region
        $region70: #{tpu_custom_call.1} parent=68 // pred_check
          %p237 = pneg %p53
        $region71: #{tpu_custom_call.1} parent=68 // pred_check_branch
          %239 = sbr.rel (%p237) target = $region73
        $region72: #{tpu_custom_call.1} parent=68 // pred_region
          _
        $region73: #{tpu_custom_call.1} parent=68 // pred_fallthru
          _
        %s240 = sand.u32 %s68, 1
        %s241 = scalar_lea.sflag [#allocation4], %s240
        %s242 = sand.u32 %s68, 1
        %s243 = smul.addr %s242, 128
        %s244 = scalar_lea.vmem [#allocation3], %s243
        // Predicated region
        $region74: #{tpu_custom_call.1} parent=68 // pred_check
          %p245 = pneg %p81
        $region75: #{tpu_custom_call.1} parent=68 // pred_check_branch
          %247 = sbr.rel (%p245) target = $region77
        $region76: #{tpu_custom_call.1} parent=68 // pred_region
          %248 = dma.done %s241, 2048
        $region77: #{tpu_custom_call.1} parent=68 // pred_fallthru
          _
        %s249 = sand.u32 %s40, 1
        %s250 = sand.u32 %s40, 1
        %s251 = smul.addr %s250, 8
        %s252 = scalar_lea.vmem [#allocation2], %s251
        %p253 = pneg %p53
        %p254 = pneg %p50
        %s255 = sand.u32 %s68, 1
        %s256 = scalar_lea.sflag [#allocation4], %s255
        %s257 = sand.u32 %s68, 1
        %s258 = smul.addr %s257, 128
        %s259 = scalar_lea.vmem [#allocation3], %s258
        %p260 = pneg %p81
        %p261 = pneg %p78
        %p262 = pneg %p102
        %p263 = pneg %p99
        %p264 = pneg %p128
        %p265 = pneg %p125
        %s266 = sand.u32 %s115, 1
        %s267 = scalar_lea.sflag [#allocation5], %s266
        %s268 = sand.u32 %s115, 1
        %s269 = smul.addr %s268, 32
        %s270 = scalar_lea.vmem [#allocation6], %s269
        %s271 = smul.u32 16, %s25
        %s272 = smul.u32 2, %s24
        %s273 = smul.u32 2, %s24
        %p275 = scmp.eq.s32.totalorder %s25, 0
        // Predicated region
        $region78: #{tpu_custom_call.1} parent=68 // pred_check
          %p276 = pneg %p275
        $region79: #{tpu_custom_call.1} parent=68 // pred_check_branch
          %278 = sbr.rel (%p276) target = $region81
        $region80: #{tpu_custom_call.1} parent=68 // pred_region
          %279 = vst [vmem:[%s270] sm:$0xff] 0.0
          %280 = vst [vmem:[%s270 + $0x8] sm:$0xff] 0.0
          %281 = vst [vmem:[%s270 + $0x10] sm:$0xff] 0.0
          %282 = vst [vmem:[%s270 + $0x18] sm:$0xff] 0.0
        $region81: #{tpu_custom_call.1} parent=68 // pred_fallthru
          _
        %v283 = vld [vmem:[%s270] sm:$0xff]
        %v284 = vld [vmem:[%s270 + $0x8] sm:$0xff]
        %v285 = vld [vmem:[%s270 + $0x10] sm:$0xff]
        %v286 = vld [vmem:[%s270 + $0x18] sm:$0xff]
        %v287 = vld [vmem:[%s236] sm:$0xf]
        %v288 = vld [vmem:[%s236 + $0x4] sm:$0xf]
        %v289 = vld [vmem:[%s244] sm:$0xff]
        %v290 = vld [vmem:[%s244 + $0x8] sm:$0xff]
        %v291 = vld [vmem:[%s244 + $0x10] sm:$0xff]
        %v292 = vld [vmem:[%s244 + $0x18] sm:$0xff]
        %v293 = vld [vmem:[%s244 + $0x20] sm:$0xff]
        %v294 = vld [vmem:[%s244 + $0x28] sm:$0xff]
        %v295 = vld [vmem:[%s244 + $0x30] sm:$0xff]
        %v296 = vld [vmem:[%s244 + $0x38] sm:$0xff]
        %v297 = vld [vmem:[%s244 + $0x40] sm:$0xff]
        %v298 = vld [vmem:[%s244 + $0x48] sm:$0xff]
        %v299 = vld [vmem:[%s244 + $0x50] sm:$0xff]
        %v300 = vld [vmem:[%s244 + $0x58] sm:$0xff]
        %v301 = vld [vmem:[%s244 + $0x60] sm:$0xff]
        %v302 = vld [vmem:[%s244 + $0x68] sm:$0xff]
        %v303 = vld [vmem:[%s244 + $0x70] sm:$0xff]
        %v304 = vld [vmem:[%s244 + $0x78] sm:$0xff]
        %v307 = vunpack.c.l.b16 %v287
        %v308 = vunpack.c.l.b16 %v288
        %v309 = vpack.c.b16 %v308, %v307
        %v327 = vunpack.c.l.b16 %v289
        %v328 = vunpack.c.h.b16 %v289
        %v329 = vunpack.c.l.b16 %v290
        %v330 = vunpack.c.h.b16 %v290
        %v331 = vunpack.c.l.b16 %v291
        %v332 = vunpack.c.h.b16 %v291
        %v333 = vunpack.c.l.b16 %v292
        %v334 = vunpack.c.h.b16 %v292
        %v335 = vunpack.c.l.b16 %v293
        %v336 = vunpack.c.h.b16 %v293
        %v337 = vunpack.c.l.b16 %v294
        %v338 = vunpack.c.h.b16 %v294
        %v339 = vunpack.c.l.b16 %v295
        %v340 = vunpack.c.h.b16 %v295
        %v341 = vunpack.c.l.b16 %v296
        %v342 = vunpack.c.h.b16 %v296
        %v343 = vunpack.c.l.b16 %v297
        %v344 = vunpack.c.h.b16 %v297
        %v345 = vunpack.c.l.b16 %v298
        %v346 = vunpack.c.h.b16 %v298
        %v347 = vunpack.c.l.b16 %v299
        %v348 = vunpack.c.h.b16 %v299
        %v349 = vunpack.c.l.b16 %v300
        %v350 = vunpack.c.h.b16 %v300
        %v351 = vunpack.c.l.b16 %v301
        %v352 = vunpack.c.h.b16 %v301
        %v353 = vunpack.c.l.b16 %v302
        %v354 = vunpack.c.h.b16 %v302
        %v355 = vunpack.c.l.b16 %v303
        %v356 = vunpack.c.h.b16 %v303
        %v357 = vunpack.c.l.b16 %v304
        %v358 = vunpack.c.h.b16 %v304
        %v359 = vpack.c.b16 %v329, %v327
        %v360 = vpack.c.b16 %v330, %v328
        %v361 = vpack.c.b16 %v333, %v331
        %v362 = vpack.c.b16 %v334, %v332
        %v363 = vpack.c.b16 %v337, %v335
        %v364 = vpack.c.b16 %v338, %v336
        %v365 = vpack.c.b16 %v341, %v339
        %v366 = vpack.c.b16 %v342, %v340
        %v367 = vpack.c.b16 %v345, %v343
        %v368 = vpack.c.b16 %v346, %v344
        %v369 = vpack.c.b16 %v349, %v347
        %v370 = vpack.c.b16 %v350, %v348
        %v371 = vpack.c.b16 %v353, %v351
        %v372 = vpack.c.b16 %v354, %v352
        %v373 = vpack.c.b16 %v357, %v355
        %v374 = vpack.c.b16 %v358, %v356
        %391 = vmatprep.subr.bf16.mxu0 %v360
        %392 = vmatpush1.bf16.msra.mxu0 %v359
        %393 = vmatprep.subr.bf16.mxu0 %v362
        %394 = vmatpush1.bf16.msra.mxu0 %v361
        %395 = vmatprep.subr.bf16.mxu0 %v364
        %396 = vmatpush1.bf16.msra.mxu0 %v363
        %397 = vmatprep.subr.bf16.mxu0 %v366
        %398 = vmatpush1.bf16.msra.mxu0 %v365
        %399 = vmatprep.subr.bf16.mxu0 %v368
        %400 = vmatpush1.bf16.msra.mxu0 %v367
        %401 = vmatprep.subr.bf16.mxu0 %v370
        %402 = vmatpush1.bf16.msra.mxu0 %v369
        %403 = vmatprep.subr.bf16.mxu0 %v372
        %404 = vmatpush1.bf16.msra.mxu0 %v371
        %405 = vmatprep.subr.bf16.mxu0 %v374
        %406 = vmatpush1.bf16.msra.mxu0 %v373
        %407 = vmatprep.subr.bf16.mxu0 0
        %408 = vmatpush1.bf16.msra.mxu0 0
        %409 = vmatprep.subr.bf16.mxu0 0
        %410 = vmatpush1.bf16.msra.mxu0 0
        %411 = vmatprep.subr.bf16.mxu0 0
        %412 = vmatpush1.bf16.msra.mxu0 0
        %413 = vmatprep.subr.bf16.mxu0 0
        %414 = vmatpush1.bf16.msra.mxu0 0
        %415 = vmatprep.subr.bf16.mxu0 0
        %416 = vmatpush1.bf16.msra.mxu0 0
        %417 = vmatprep.subr.bf16.mxu0 0
        %418 = vmatpush1.bf16.msra.mxu0 0
        %419 = vmatprep.subr.bf16.mxu0 0
        %420 = vmatpush1.bf16.msra.mxu0 0
        %421 = vmatprep.subr.bf16.mxu0 0
        %422 = vmatpush1.bf16.msra.mxu0 0
        %423 = vmatprep.mubr.bf16.mxu0 0
        %424 = vmatmul.mubr.bf16.gmra.mrb[0].mxu0 %v309
        %v425 = vpop.f32.mrb[0].mxu0
        %v426 = vadd.f32 0.0, %v425
        %v427 = vpop.f32.mrb[0].mxu0
        %v428 = vadd.f32 0.0, %v427
        %v429 = vpop.f32.mrb[0].mxu0
        %v430 = vadd.f32 0.0, %v429
        %v431 = vpop.f32.mrb[0].mxu0
        %v432 = vadd.f32 0.0, %v431
        %433 = vdwg.mxu0
        %v434 = vadd.f32 %v283, %v426
        %v435 = vadd.f32 %v284, %v428
        %v436 = vadd.f32 %v285, %v430
        %v437 = vadd.f32 %v286, %v432
        %438 = vst [vmem:[%s270] sm:$0xff] %v434
        %439 = vst [vmem:[%s270 + $0x8] sm:$0xff] %v435
        %440 = vst [vmem:[%s270 + $0x10] sm:$0xff] %v436
        %441 = vst [vmem:[%s270 + $0x18] sm:$0xff] %v437
        %p442 = scmp.eq.s32.totalorder %s25, 1
        // Predicated region
        $region82: #{tpu_custom_call.1} parent=68 // pred_check
          %p443 = pneg %p442
        $region83: #{tpu_custom_call.1} parent=68 // pred_check_branch
          %445 = sbr.rel (%p443) target = $region85
        $region84: #{tpu_custom_call.1} parent=68 // pred_region
          %v446 = vld [vmem:[%s270] sm:$0xff]
          %v447 = vld [vmem:[%s270 + $0x8] sm:$0xff]
          %v448 = vld [vmem:[%s270 + $0x10] sm:$0xff]
          %v449 = vld [vmem:[%s270 + $0x18] sm:$0xff]
          %v450 = vld [vmem:[%s2] sm:$0xff]
          %v451 = vld [vmem:[%s2 + $0x8] sm:$0xff]
          %453 = vset.pattern.permute.xlu0 0
          %454 = vperm.xlu0 %453, %v450
          %v455 = vpop.permute.xlu0 %454
          %458 = vset.pattern.permute.xlu0 0
          %459 = vperm.xlu0 %458, %v451
          %v460 = vpop.permute.xlu0 %459
          %v462 = vadd.f32 %v446, %v455
          %v463 = vadd.f32 %v447, %v455
          %v464 = vadd.f32 %v448, %v460
          %v465 = vadd.f32 %v449, %v460
          %466 = vst [vmem:[%s270] sm:$0xff] %v462
          %467 = vst [vmem:[%s270 + $0x8] sm:$0xff] %v463
          %468 = vst [vmem:[%s270 + $0x10] sm:$0xff] %v464
          %469 = vst [vmem:[%s270 + $0x18] sm:$0xff] %v465
        $region85: #{tpu_custom_call.1} parent=68 // pred_fallthru
          _
        %s470 = sand.u32 %s115, 1
        %s471 = scalar_lea.sflag [#allocation5], %s470
        %s472 = sand.u32 %s115, 1
        %s473 = smul.addr %s472, 32
        %s474 = scalar_lea.vmem [#allocation6], %s473
        // Predicated region
        $region86: #{tpu_custom_call.1} parent=68 // pred_check
          %p475 = pneg %p125
        $region87: #{tpu_custom_call.1} parent=68 // pred_check_branch
          %477 = sbr.rel (%p475) target = $region89
        $region88: #{tpu_custom_call.1} parent=68 // pred_region
          %s478 = smul.u32 2, %s24
          %s480 = ssub.s32 512, 512
          %481 = vsyncadd %s471, %s480
          %s482 = smul.addr %s478, 128
          %s483 = scalar_lea.hbm %s3, %s482
          %s484 = sshll.u32 %s474, 4
          %s485 = int_to_ptr.vmem [resolvable:$true] %s484
          %490 = dma.vmem_to_hbm [thread:$0]  %s485, 512, %s483, %s471, 256, 512, 16
        $region89: #{tpu_custom_call.1} parent=68 // pred_fallthru
          _
      $region69: #{tpu_custom_call.1} parent=5 // pred_fallthru
        _
      %p491 = scmp.le.s32.totalorder 2, %s15
      // Predicated region
      $region90: #{tpu_custom_call.1} parent=5 // pred_check
        %p492 = pneg %p491
      $region91: #{tpu_custom_call.1} parent=5 // pred_check_branch
        %494 = sbr.rel (%p492) target = $region93
      $region92: #{tpu_custom_call.1} parent=5 // pred_region
        %s495 = ssub.s32 %s15, 2
        // Predicated region
        $region94: #{tpu_custom_call.1} parent=92 // pred_check
          %p496 = pneg %p131
        $region95: #{tpu_custom_call.1} parent=92 // pred_check_branch
          %498 = sbr.rel (%p496) target = $region97
        $region96: #{tpu_custom_call.1} parent=92 // pred_region
          %s499 = sand.u32 %s116, 1
          %s500 = scalar_lea.sflag [#allocation5], %s499
          %s501 = sand.u32 %s116, 1
          %s502 = smul.addr %s501, 32
          %s503 = scalar_lea.vmem [#allocation6], %s502
          %504 = dma.done %s500, 512
        $region97: #{tpu_custom_call.1} parent=92 // pred_fallthru
          _
      $region93: #{tpu_custom_call.1} parent=5 // pred_fallthru
        _
    $region6: #{tpu_custom_call.1} parent=1 // loop_footer
      %s19 = sadd.s32 1, %s15
    $region7: #{tpu_custom_call.1} parent=1 // loop_footer_branch
      %14 = sbr.rel target = $region3
    $region8: #{tpu_custom_call.1} parent=1 // loop_exit
      _
    %505 = vsyncpa [#allocation4], 1
    %s506 = scalar_lea.sflag [#allocation4], 1
    %507 = vsyncpa %s506, 1
    %508 = vsyncpa [#allocation5], 1
    %s509 = scalar_lea.sflag [#allocation5], 1
    %510 = vsyncpa %s509, 1

</llo_original>
